<compile_context>
chip_gen: v6e
topology: v6e:2x2x1
jax: 0.10.0
libtpu: 0.0.40
codegen_flags: <defaults>
</compile_context>

<pallas_src>
import jax
import jax.numpy as jnp
from jax.experimental import pallas as pl
from jax.experimental.pallas import tpu as pltpu


# ----------------------------------------------------------------------------
# Budgets / tiling helpers
# ----------------------------------------------------------------------------

def _vmem_budgets():
    """Generation-aware VMEM budgets (bytes)."""
    kind = ""
    try:
        kind = jax.devices()[0].device_kind.lower()
    except Exception:
        pass
    big_vmem = any(t in kind for t in ("v4", "v5", "v6"))  # 128 MiB parts
    if big_vmem:
        return dict(fuse_budget=90 << 20, fuse_vmem_limit=100 << 20,
                    tile_budget=12 << 20, stream_vmem_limit=64 << 20)
    # v7x-class (64 MiB per TensorCore) or unknown: conservative.
    return dict(fuse_budget=40 << 20, fuse_vmem_limit=48 << 20,
                tile_budget=5 << 20, stream_vmem_limit=48 << 20)


def _choose_spatial_tile(total, quantum, bytes_per_unit, budget_bytes):
    """Largest divisor T of `total` that is a multiple of `quantum` whose
    double-buffered working set (2 * bytes_per_unit * T) fits the budget.
    Falls back to the smallest legal tile, then to the full extent."""
    if total % quantum == 0:
        divs = [d for d in range(quantum, total + 1, quantum) if total % d == 0]
        fit = [d for d in divs if 2 * bytes_per_unit * d <= budget_bytes]
        if fit:
            return max(fit)
        if divs:
            return min(divs)
    # Block dim equal to the full array dim is always legal.
    return total


# ----------------------------------------------------------------------------
# Kernels
# ----------------------------------------------------------------------------

def _make_fused_kernel(m, inv_hw):
    """Single pass per sample: squeeze -> shared MLP -> sigmoid gate -> scale.
    All gate math stays in the 'channel on sublanes' column layout so no
    lane<->sublane relayout is needed inside the kernel."""
    def kernel(*refs):
        x_refs = refs[:m]
        w1t_ref, b1_ref, w2t_ref, b2_ref = refs[m:m + 4]   # (M,R,C),(R,1),(M,C,R),(M,C,1)
        y_refs = refs[m + 4:]

        # ---- squeeze + first FC (accumulated over modalities) ----
        h = b1_ref[...]                                               # (R, 1)
        for i in range(m):
            s = jnp.sum(x_refs[i][...].astype(jnp.float32),
                        axis=-1, keepdims=True)[0] * inv_hw           # (C, 1)
            h = h + jnp.dot(w1t_ref[i], s,
                            preferred_element_type=jnp.float32)       # (R, 1)
        h = jnp.maximum(h, 0.0)

        # ---- excite + channel-wise rescale ----
        for i in range(m):
            g = jax.nn.sigmoid(
                jnp.dot(w2t_ref[i], h, preferred_element_type=jnp.float32)
                + b2_ref[i])                                          # (C, 1)
            x = x_refs[i][...]                                        # (1, C, HW)
            y_refs[i][...] = x * g[None].astype(x.dtype)              # bcast over lanes
    return kernel


def _make_squeeze_kernel_flat(m):
    """Two-pass path, flat [1,C,T] tiles: accumulate per-channel spatial sums
    into tiny resident (1,C,1) output blocks across the 'arbitrary' tile axis."""
    def kernel(*refs):
        x_refs = refs[:m]
        out_refs = refs[m:]
        k = pl.program_id(1)

        @pl.when(k == 0)
        def _init():
            for i in range(m):
                out_refs[i][...] = jnp.zeros_like(out_refs[i])

        for i in range(m):
            out_refs[i][...] += jnp.sum(x_refs[i][...].astype(jnp.float32),
                                        axis=-1, keepdims=True)       # (1, C, 1)
    return kernel


def _make_squeeze_kernel_4d(m):
    """Two-pass path, spatial-on-sublane [1,C,T,128] tiles: accumulate
    lane-partial sums (VALU/sublane reduce only); the final cross-lane
    reduction is hoisted into the tiny JAX epilogue."""
    def kernel(*refs):
        x_refs = refs[:m]
        out_refs = refs[m:]
        k = pl.program_id(1)

        @pl.when(k == 0)
        def _init():
            for i in range(m):
                out_refs[i][...] = jnp.zeros_like(out_refs[i])

        for i in range(m):
            out_refs[i][...] += jnp.sum(x_refs[i][...].astype(jnp.float32),
                                        axis=2, keepdims=True)        # (1, C, 1, 128)
    return kernel


def _make_scale_kernel(m):
    """Streaming channel-wise rescale: y[i] = x[i] * gate[i]; each tile is
    read/written exactly once, so this runs at the HBM streaming roofline."""
    def kernel(*refs):
        x_refs = refs[:m]
        g_refs = refs[m:2 * m]
        y_refs = refs[2 * m:]
        for i in range(m):
            x = x_refs[i][...]
            y_refs[i][...] = x * g_refs[i][...].astype(x.dtype)
    return kernel


# ----------------------------------------------------------------------------
# Wrapper
# ----------------------------------------------------------------------------

def multimodal_se_layer(modalities, w1, b1, w2, b2, *,
                        force_two_pass=False,
                        tile_budget_bytes=None,
                        donate_inputs=False):
    """modalities: list of M arrays [N, C, H, W] (same shape/dtype).
    Returns list of M arrays [N, C, H, W], channel-rescaled by SE gates
    computed jointly over the M*C concatenated pooled channels."""
    m = len(modalities)
    n, c, h, w = modalities[0].shape
    assert all(mod.shape == modalities[0].shape for mod in modalities)
    hw = h * w
    mc, r = w1.shape
    assert mc == m * c
    x_dtype = modalities[0].dtype
    itemsize = jnp.dtype(x_dtype).itemsize
    sub_pack = max(8, 32 // itemsize)            # sublane packing (8 f32, 16 bf16)
    c_pad = -(-c // sub_pack) * sub_pack
    hw_pad = -(-hw // 128) * 128
    inv_hw = 1.0 / float(hw)

    budgets = _vmem_budgets()
    if tile_budget_bytes is None:
        tile_budget_bytes = budgets["tile_budget"]

    # ------------------------------------------------------------------
    # Fused single-pass path: 1 read + 1 write of the activations.
    # Per grid step (one sample): M in + M out slabs, double-buffered,
    # padded to the (sub_pack, 128) tile grid in VMEM.
    # ------------------------------------------------------------------
    fused_step_bytes = 2 * (2 * m) * c_pad * hw_pad * itemsize + (64 << 10)
    if (not force_two_pass) and fused_step_bytes <= budgets["fuse_budget"]:
        xs = [mod.reshape(n, c, hw) for mod in modalities]

        # Re-block the tiny weights per modality in "column" orientation so
        # the gate math never leaves the channel-on-sublane layout.
        w1t = w1.astype(jnp.float32).reshape(m, c, r).transpose(0, 2, 1)   # (M, R, C)
        b1c = b1.astype(jnp.float32).reshape(r, 1)                          # (R, 1)
        w2t = w2.astype(jnp.float32).reshape(r, m, c).transpose(1, 2, 0)    # (M, C, R)
        b2c = b2.astype(jnp.float32).reshape(m, c, 1)                       # (M, C, 1)

        x_spec = pl.BlockSpec((1, c, hw), lambda ni: (ni, 0, 0))
        w_specs = [
            pl.BlockSpec(w1t.shape, lambda ni: (0, 0, 0)),
            pl.BlockSpec(b1c.shape, lambda ni: (0, 0)),
            pl.BlockSpec(w2t.shape, lambda ni: (0, 0, 0)),
            pl.BlockSpec(b2c.shape, lambda ni: (0, 0, 0)),
        ]

        ys = pl.pallas_call(
            _make_fused_kernel(m, inv_hw),
            out_shape=tuple(jax.ShapeDtypeStruct((n, c, hw), x_dtype)
                            for _ in range(m)),
            grid=(n,),
            in_specs=[x_spec] * m + w_specs,
            out_specs=tuple([x_spec] * m),
            compiler_params=pltpu.CompilerParams(
                dimension_semantics=("parallel",),
                vmem_limit_bytes=budgets["fuse_vmem_limit"]),
        )(*xs, w1t, b1c, w2t, b2c)
        if not isinstance(ys, (list, tuple)):
            ys = (ys,)
        return [y.reshape(n, c, h, w) for y in ys]

    # ------------------------------------------------------------------
    # Two-pass streaming fallback (activations too large to keep resident).
    # ------------------------------------------------------------------
    four_d = (hw % 128 == 0) and ((hw // 128) % 8 == 0)
    if four_d:
        s_len = hw // 128
        xs = [mod.reshape(n, c, s_len, 128) for mod in modalities]
        quantum, lane_w, total = 8, 128, s_len
        cs = c                       # C is a major dim: no sublane padding
    else:
        # TODO(synk): for huge HW that is not a multiple of 8*128 this uses a
        # full-row block which may exceed the VMEM budget; pad HW if needed.
        xs = [mod.reshape(n, c, hw) for mod in modalities]
        quantum, lane_w, total = 128, 1, hw
        cs = c_pad

    # Pass 1 streams only the M inputs -> automatically ~2x larger tile than
    # pass 2 (which streams M inputs + M outputs) for the same budget.
    bpu1 = m * cs * lane_w * itemsize
    bpu2 = 2 * m * cs * lane_w * itemsize
    t1 = _choose_spatial_tile(total, quantum, bpu1, tile_budget_bytes)
    t2 = _choose_spatial_tile(total, quantum, bpu2, tile_budget_bytes)

    # ---- pass 1: squeeze (spatial sums); excite MLP hoisted out of the grid ----
    if four_d:
        x1_spec = pl.BlockSpec((1, c, t1, 128), lambda ni, ki: (ni, 0, ki, 0))
        p_spec = pl.BlockSpec((1, c, 1, 128), lambda ni, ki: (ni, 0, 0, 0))
        p_shape = (n, c, 1, 128)
        squeeze_kernel = _make_squeeze_kernel_4d(m)
    else:
        x1_spec = pl.BlockSpec((1, c, t1), lambda ni, ki: (ni, 0, ki))
        p_spec = pl.BlockSpec((1, c, 1), lambda ni, ki: (ni, 0, 0))
        p_shape = (n, c, 1)
        squeeze_kernel = _make_squeeze_kernel_flat(m)

    pooled = pl.pallas_call(
        squeeze_kernel,
        out_shape=tuple(jax.ShapeDtypeStruct(p_shape, jnp.float32)
                        for _ in range(m)),
        grid=(n, total // t1),
        in_specs=[x1_spec] * m,
        out_specs=tuple([p_spec] * m),
        compiler_params=pltpu.CompilerParams(
            dimension_semantics=("parallel", "arbitrary"),
            vmem_limit_bytes=budgets["stream_vmem_limit"]),
    )(*xs)
    if not isinstance(pooled, (list, tuple)):
        pooled = (pooled,)

    # ---- excite MLP: one batched (N, M*C) x (M*C, R) matmul in plain JAX ----
    s = jnp.concatenate([p.reshape(n, c, -1).sum(-1) for p in pooled],
                        axis=-1) * inv_hw                              # (N, M*C)
    hid = jnp.maximum(s @ w1.astype(jnp.float32) + b1.astype(jnp.float32), 0.0)
    g = jax.nn.sigmoid(hid @ w2.astype(jnp.float32) + b2.astype(jnp.float32))  # (N, M*C)

    if four_d:
        gates = [jnp.broadcast_to(g[:, i * c:(i + 1) * c].reshape(n, c, 1, 1),
                                  (n, c, 1, 128)) for i in range(m)]
        g_spec = pl.BlockSpec((1, c, 1, 128), lambda ni, ki: (ni, 0, 0, 0))
        x2_spec = pl.BlockSpec((1, c, t2, 128), lambda ni, ki: (ni, 0, ki, 0))
    else:
        gates = [g[:, i * c:(i + 1) * c].reshape(n, c, 1) for i in range(m)]
        g_spec = pl.BlockSpec((1, c, 1), lambda ni, ki: (ni, 0, 0))
        x2_spec = pl.BlockSpec((1, c, t2), lambda ni, ki: (ni, 0, ki))

    # ---- pass 2: fully parallel, pipelined channel-wise rescale ----
    io_alias = {i: i for i in range(m)} if donate_inputs else {}
    ys = pl.pallas_call(
        _make_scale_kernel(m),
        out_shape=tuple(jax.ShapeDtypeStruct(xs[0].shape, x_dtype)
                        for _ in range(m)),
        grid=(n, total // t2),
        in_specs=[x2_spec] * m + [g_spec] * m,
        out_specs=tuple([x2_spec] * m),
        input_output_aliases=io_alias,
        compiler_params=pltpu.CompilerParams(
            dimension_semantics=("parallel", "parallel"),
            vmem_limit_bytes=budgets["stream_vmem_limit"]),
    )(*xs, *gates)
    if not isinstance(ys, (list, tuple)):
        ys = (ys,)
    return [y.reshape(n, c, h, w) for y in ys]


# ----------------------------------------------------------------------------
# Self-test
# ----------------------------------------------------------------------------

if __name__ == "__main__":
    key = jax.random.PRNGKey(0)
    k1, k2, k3, k4 = jax.random.split(key, 4)

    # Small shapes: 2 modalities, each NCHW = [2, 4, 16, 16].
    N, C, H, W, M = 2, 4, 16, 16, 2
    MC = M * C
    R = max(MC // 4, 1)   # reduction ratio 4

    mod_a = jax.random.normal(k1, (N, C, H, W), dtype=jnp.float32)
    mod_b = jax.random.normal(k2, (N, C, H, W), dtype=jnp.float32)

    # Deterministic synthetic SE weights (fc1: MC->R, fc2: R->MC).
    w1 = jax.random.normal(k3, (MC, R), dtype=jnp.float32) * 0.1
    b1 = jnp.zeros((R,), dtype=jnp.float32)
    w2 = jax.random.normal(k4, (R, MC), dtype=jnp.float32) * 0.1
    b2 = jnp.zeros((MC,), dtype=jnp.float32)

    def ref_fn(mods):
        n_, c_, h_, w_ = mods[0].shape
        x = jnp.concatenate(mods, axis=1).reshape(n_, len(mods) * c_, h_ * w_)
        s_ = x.mean(-1)
        g_ = jax.nn.sigmoid(jnp.maximum(s_ @ w1 + b1, 0.0) @ w2 + b2)
        return (x * g_[:, :, None]).reshape(n_, len(mods) * c_, h_, w_)

    # 1) Fused single-pass path (default for shapes that fit VMEM).
    outs = multimodal_se_layer([mod_a, mod_b], w1, b1, w2, b2)
    outs = [jax.block_until_ready(o) for o in outs]
    got = jnp.concatenate(outs, axis=1)
    assert jnp.allclose(got, ref_fn([mod_a, mod_b]), atol=1e-4, rtol=1e-4), \
        "fused path mismatch vs JAX reference"

    # 2) Two-pass streaming fallback, flat layout, multiple tiles
    #    (forced via a tiny tile budget to exercise the accumulator).
    outs2 = multimodal_se_layer([mod_a, mod_b], w1, b1, w2, b2,
                                force_two_pass=True, tile_budget_bytes=2048)
    outs2 = [jax.block_until_ready(o) for o in outs2]
    got2 = jnp.concatenate(outs2, axis=1)
    assert jnp.allclose(got2, ref_fn([mod_a, mod_b]), atol=1e-4, rtol=1e-4), \
        "two-pass (flat) path mismatch vs JAX reference"

    # 3) Two-pass streaming fallback, spatial-on-sublane layout, multiple tiles.
    H3, W3 = 64, 32            # HW = 2048 -> S = 16 (multiple of 8) -> 4-D layout
    mod_c = jax.random.normal(k1, (N, C, H3, W3), dtype=jnp.float32)
    mod_d = jax.random.normal(k2, (N, C, H3, W3), dtype=jnp.float32)
    outs3 = multimodal_se_layer([mod_c, mod_d], w1, b1, w2, b2,
                                force_two_pass=True, tile_budget_bytes=64 * 1024)
    outs3 = [jax.block_until_ready(o) for o in outs3]
    got3 = jnp.concatenate(outs3, axis=1)
    assert jnp.allclose(got3, ref_fn([mod_c, mod_d]), atol=1e-4, rtol=1e-4), \
        "two-pass (spatial-on-sublane) path mismatch vs JAX reference"

    print("KERNEL_OK")
</pallas_src>

<mosaic_0001>
module attributes {stable_mosaic.version = 11 : i64} {
  func.func @kernel(%arg0: i32, %arg1: memref<1x4x256xf32, #tpu.memory_space<vmem>>, %arg2: memref<1x4x256xf32, #tpu.memory_space<vmem>>, %arg3: memref<2x2x4xf32, #tpu.memory_space<vmem>>, %arg4: memref<2x1xf32, #tpu.memory_space<vmem>>, %arg5: memref<2x4x2xf32, #tpu.memory_space<vmem>>, %arg6: memref<2x4x1xf32, #tpu.memory_space<vmem>>, %arg7: memref<1x4x256xf32, #tpu.memory_space<vmem>>, %arg8: memref<1x4x256xf32, #tpu.memory_space<vmem>>) attributes {dimension_semantics = [#tpu.dimension_semantics<parallel>], iteration_bounds = array<i64: 2>, scalar_prefetch = 0 : i64, scratch_operands = 0 : i64, tpu.core_type = #tpu.core_type<tc>, window_params = [{transform_indices = @transform_0, window_bounds = array<i64: 1, 4, 256>}, {transform_indices = @transform_1, window_bounds = array<i64: 1, 4, 256>}, {pipeline_mode = #tpu.pipeline_mode<synchronous>, transform_indices = @transform_2, window_bounds = array<i64: 2, 2, 4>}, {pipeline_mode = #tpu.pipeline_mode<synchronous>, transform_indices = @transform_3, window_bounds = array<i64: 2, 1>}, {pipeline_mode = #tpu.pipeline_mode<synchronous>, transform_indices = @transform_4, window_bounds = array<i64: 2, 4, 2>}, {pipeline_mode = #tpu.pipeline_mode<synchronous>, transform_indices = @transform_5, window_bounds = array<i64: 2, 4, 1>}, {transform_indices = @transform_6, window_bounds = array<i64: 1, 4, 256>}, {transform_indices = @transform_7, window_bounds = array<i64: 1, 4, 256>}]} {
    %c0 = arith.constant 0 : index
    %c0_0 = arith.constant 0 : index
    %0 = vector.load %arg4[%c0, %c0_0] : memref<2x1xf32, #tpu.memory_space<vmem>>, vector<2x1xf32>
    %c0_1 = arith.constant 0 : index
    %c0_2 = arith.constant 0 : index
    %c0_3 = arith.constant 0 : index
    %1 = vector.load %arg1[%c0_1, %c0_2, %c0_3] : memref<1x4x256xf32, #tpu.memory_space<vmem>>, vector<1x4x256xf32>
    %cst = arith.constant dense<0.000000e+00> : vector<1x4xf32>
    %2 = vector.multi_reduction <add>, %1, %cst [2] : vector<1x4x256xf32> to vector<1x4xf32>
    %3 = vector.shape_cast %2 : vector<1x4xf32> to vector<1x4x1xf32>
    %4 = vector.shape_cast %3 : vector<1x4x1xf32> to vector<4x1xf32>
    %cst_4 = arith.constant 3.906250e-03 : f32
    %5 = vector.broadcast %cst_4 : f32 to vector<4x1xf32>
    %6 = arith.mulf %4, %5 : vector<4x1xf32>
    %c0_5 = arith.constant 0 : index
    %c0_6 = arith.constant 0 : index
    %c0_7 = arith.constant 0 : index
    %7 = vector.load %arg3[%c0_5, %c0_6, %c0_7] : memref<2x2x4xf32, #tpu.memory_space<vmem>>, vector<1x2x4xf32>
    %8 = vector.shape_cast %7 : vector<1x2x4xf32> to vector<2x4xf32>
    %cst_8 = arith.constant dense<0.000000e+00> : vector<2x1xf32>
    %9 = tpu.matmul %8, %6, %cst_8 {dimension_numbers = #tpu.dot_dimension_numbers<[1], [0], [0], [1], [0, 0, 1, 1], [], []>} : vector<2x4xf32>, vector<4x1xf32>, vector<2x1xf32> -> vector<2x1xf32>
    %10 = arith.addf %0, %9 : vector<2x1xf32>
    %c0_9 = arith.constant 0 : index
    %c0_10 = arith.constant 0 : index
    %c0_11 = arith.constant 0 : index
    %11 = vector.load %arg2[%c0_9, %c0_10, %c0_11] : memref<1x4x256xf32, #tpu.memory_space<vmem>>, vector<1x4x256xf32>
    %cst_12 = arith.constant dense<0.000000e+00> : vector<1x4xf32>
    %12 = vector.multi_reduction <add>, %11, %cst_12 [2] : vector<1x4x256xf32> to vector<1x4xf32>
    %13 = vector.shape_cast %12 : vector<1x4xf32> to vector<1x4x1xf32>
    %14 = vector.shape_cast %13 : vector<1x4x1xf32> to vector<4x1xf32>
    %cst_13 = arith.constant 3.906250e-03 : f32
    %15 = vector.broadcast %cst_13 : f32 to vector<4x1xf32>
    %16 = arith.mulf %14, %15 : vector<4x1xf32>
    %c1 = arith.constant 1 : index
    %c0_14 = arith.constant 0 : index
    %c0_15 = arith.constant 0 : index
    %17 = vector.load %arg3[%c1, %c0_14, %c0_15] : memref<2x2x4xf32, #tpu.memory_space<vmem>>, vector<1x2x4xf32>
    %18 = vector.shape_cast %17 : vector<1x2x4xf32> to vector<2x4xf32>
    %cst_16 = arith.constant dense<0.000000e+00> : vector<2x1xf32>
    %19 = tpu.matmul %18, %16, %cst_16 {dimension_numbers = #tpu.dot_dimension_numbers<[1], [0], [0], [1], [0, 0, 1, 1], [], []>} : vector<2x4xf32>, vector<4x1xf32>, vector<2x1xf32> -> vector<2x1xf32>
    %20 = arith.addf %10, %19 : vector<2x1xf32>
    %cst_17 = arith.constant 0.000000e+00 : f32
    %21 = vector.broadcast %cst_17 : f32 to vector<2x1xf32>
    %22 = arith.maximumf %20, %21 : vector<2x1xf32>
    %c0_18 = arith.constant 0 : index
    %c0_19 = arith.constant 0 : index
    %c0_20 = arith.constant 0 : index
    %23 = vector.load %arg5[%c0_18, %c0_19, %c0_20] : memref<2x4x2xf32, #tpu.memory_space<vmem>>, vector<1x4x2xf32>
    %24 = vector.shape_cast %23 : vector<1x4x2xf32> to vector<4x2xf32>
    %cst_21 = arith.constant dense<0.000000e+00> : vector<4x1xf32>
    %25 = tpu.matmul %24, %22, %cst_21 {dimension_numbers = #tpu.dot_dimension_numbers<[1], [0], [0], [1], [0, 0, 1, 1], [], []>} : vector<4x2xf32>, vector<2x1xf32>, vector<4x1xf32> -> vector<4x1xf32>
    %c0_22 = arith.constant 0 : index
    %c0_23 = arith.constant 0 : index
    %c0_24 = arith.constant 0 : index
    %26 = vector.load %arg6[%c0_22, %c0_23, %c0_24] : memref<2x4x1xf32, #tpu.memory_space<vmem>>, vector<1x4x1xf32>
    %27 = vector.shape_cast %26 : vector<1x4x1xf32> to vector<4x1xf32>
    %28 = arith.addf %25, %27 : vector<4x1xf32>
    %29 = arith.negf %28 : vector<4x1xf32>
    %30 = math.exp %29 : vector<4x1xf32>
    %cst_25 = arith.constant 1.000000e+00 : f32
    %31 = vector.broadcast %cst_25 : f32 to vector<4x1xf32>
    %32 = arith.addf %31, %30 : vector<4x1xf32>
    %33 = arith.divf %31, %32 : vector<4x1xf32>
    %c0_26 = arith.constant 0 : index
    %c0_27 = arith.constant 0 : index
    %c0_28 = arith.constant 0 : index
    %34 = vector.load %arg1[%c0_26, %c0_27, %c0_28] : memref<1x4x256xf32, #tpu.memory_space<vmem>>, vector<1x4x256xf32>
    %35 = vector.shape_cast %33 : vector<4x1xf32> to vector<1x4x1xf32>
    %36 = vector.broadcast %35 : vector<1x4x1xf32> to vector<1x4x256xf32>
    %37 = arith.mulf %34, %36 : vector<1x4x256xf32>
    %c0_29 = arith.constant 0 : index
    %c0_30 = arith.constant 0 : index
    %c0_31 = arith.constant 0 : index
    %38 = vector.load %arg7[%c0_29, %c0_30, %c0_31] : memref<1x4x256xf32, #tpu.memory_space<vmem>>, vector<1x4x256xf32>
    tpu.vector_store %arg7[%c0_29, %c0_30, %c0_31], %37 {strides = array<i32>} : memref<1x4x256xf32, #tpu.memory_space<vmem>>, vector<1x4x256xf32>,
    %c1_32 = arith.constant 1 : index
    %c0_33 = arith.constant 0 : index
    %c0_34 = arith.constant 0 : index
    %39 = vector.load %arg5[%c1_32, %c0_33, %c0_34] : memref<2x4x2xf32, #tpu.memory_space<vmem>>, vector<1x4x2xf32>
    %40 = vector.shape_cast %39 : vector<1x4x2xf32> to vector<4x2xf32>
    %cst_35 = arith.constant dense<0.000000e+00> : vector<4x1xf32>
    %41 = tpu.matmul %40, %22, %cst_35 {dimension_numbers = #tpu.dot_dimension_numbers<[1], [0], [0], [1], [0, 0, 1, 1], [], []>} : vector<4x2xf32>, vector<2x1xf32>, vector<4x1xf32> -> vector<4x1xf32>
    %c1_36 = arith.constant 1 : index
    %c0_37 = arith.constant 0 : index
    %c0_38 = arith.constant 0 : index
    %42 = vector.load %arg6[%c1_36, %c0_37, %c0_38] : memref<2x4x1xf32, #tpu.memory_space<vmem>>, vector<1x4x1xf32>
    %43 = vector.shape_cast %42 : vector<1x4x1xf32> to vector<4x1xf32>
    %44 = arith.addf %41, %43 : vector<4x1xf32>
    %45 = arith.negf %44 : vector<4x1xf32>
    %46 = math.exp %45 : vector<4x1xf32>
    %cst_39 = arith.constant 1.000000e+00 : f32
    %47 = vector.broadcast %cst_39 : f32 to vector<4x1xf32>
    %48 = arith.addf %47, %46 : vector<4x1xf32>
    %49 = arith.divf %47, %48 : vector<4x1xf32>
    %c0_40 = arith.constant 0 : index
    %c0_41 = arith.constant 0 : index
    %c0_42 = arith.constant 0 : index
    %50 = vector.load %arg2[%c0_40, %c0_41, %c0_42] : memref<1x4x256xf32, #tpu.memory_space<vmem>>, vector<1x4x256xf32>
    %51 = vector.shape_cast %49 : vector<4x1xf32> to vector<1x4x1xf32>
    %52 = vector.broadcast %51 : vector<1x4x1xf32> to vector<1x4x256xf32>
    %53 = arith.mulf %50, %52 : vector<1x4x256xf32>
    %c0_43 = arith.constant 0 : index
    %c0_44 = arith.constant 0 : index
    %c0_45 = arith.constant 0 : index
    %54 = vector.load %arg8[%c0_43, %c0_44, %c0_45] : memref<1x4x256xf32, #tpu.memory_space<vmem>>, vector<1x4x256xf32>
    tpu.vector_store %arg8[%c0_43, %c0_44, %c0_45], %53 {strides = array<i32>} : memref<1x4x256xf32, #tpu.memory_space<vmem>>, vector<1x4x256xf32>,
    return
  }
  func.func @transform_0(%arg0: i32) -> (i32, i32, i32) {
    %c0_i32 = arith.constant 0 : i32
    %c0_i32_0 = arith.constant 0 : i32
    %c0_i32_1 = arith.constant 0 : i32
    return %arg0, %c0_i32, %c0_i32_0 : i32, i32, i32
  }
  func.func @transform_1(%arg0: i32) -> (i32, i32, i32) {
    %c0_i32 = arith.constant 0 : i32
    %c0_i32_0 = arith.constant 0 : i32
    %c0_i32_1 = arith.constant 0 : i32
    return %arg0, %c0_i32, %c0_i32_0 : i32, i32, i32
  }
  func.func @transform_2(%arg0: i32) -> (i32, i32, i32) {
    %c0_i32 = arith.constant 0 : i32
    %c0_i32_0 = arith.constant 0 : i32
    %c0_i32_1 = arith.constant 0 : i32
    %c0_i32_2 = arith.constant 0 : i32
    return %c0_i32, %c0_i32_0, %c0_i32_1 : i32, i32, i32
  }
  func.func @transform_3(%arg0: i32) -> (i32, i32) {
    %c0_i32 = arith.constant 0 : i32
    %c0_i32_0 = arith.constant 0 : i32
    %c0_i32_1 = arith.constant 0 : i32
    return %c0_i32, %c0_i32_0 : i32, i32
  }
  func.func @transform_4(%arg0: i32) -> (i32, i32, i32) {
    %c0_i32 = arith.constant 0 : i32
    %c0_i32_0 = arith.constant 0 : i32
    %c0_i32_1 = arith.constant 0 : i32
    %c0_i32_2 = arith.constant 0 : i32
    return %c0_i32, %c0_i32_0, %c0_i32_1 : i32, i32, i32
  }
  func.func @transform_5(%arg0: i32) -> (i32, i32, i32) {
    %c0_i32 = arith.constant 0 : i32
    %c0_i32_0 = arith.constant 0 : i32
    %c0_i32_1 = arith.constant 0 : i32
    %c0_i32_2 = arith.constant 0 : i32
    return %c0_i32, %c0_i32_0, %c0_i32_1 : i32, i32, i32
  }
  func.func @transform_6(%arg0: i32) -> (i32, i32, i32) {
    %c0_i32 = arith.constant 0 : i32
    %c0_i32_0 = arith.constant 0 : i32
    %c0_i32_1 = arith.constant 0 : i32
    return %arg0, %c0_i32, %c0_i32_0 : i32, i32, i32
  }
  func.func @transform_7(%arg0: i32) -> (i32, i32, i32) {
    %c0_i32 = arith.constant 0 : i32
    %c0_i32_0 = arith.constant 0 : i32
    %c0_i32_1 = arith.constant 0 : i32
    return %arg0, %c0_i32, %c0_i32_0 : i32, i32, i32
  }
}

</mosaic_0001>

<llo_original>
// kernel: tpu_custom_call.1
$region0: #{tpu_custom_call.1}
  #allocation0 [shape = 'u32[]', space=smem, size = 0x4, offset = 0x4, fixed_abs, tag = 'smem constant byte address 0x4 - core index']
  #allocation1 [shape = 'u32[144,128]{1,0:T(1,128)}', space=vmem, size = 0x12000, scoped, tag = 'internal scratch']
  %s0 = inlined_call_operand.vmem [shape: f32[2,4,256], index: 0, kind: input, shape index: {}]
  %s1 = inlined_call_operand.hbm [shape: f32[2,4,256], index: 1, kind: input, shape index: {}]
  %s2 = inlined_call_operand.vmem [shape: f32[2,2,4], index: 2, kind: input, shape index: {}]
  %s3 = inlined_call_operand.vmem [shape: f32[2,1], index: 3, kind: input, shape index: {}]
  %s4 = inlined_call_operand.vmem [shape: f32[2,4,2], index: 4, kind: input, shape index: {}]
  %s5 = inlined_call_operand.vmem [shape: f32[2,4,1], index: 5, kind: input, shape index: {}]
  %s6 = inlined_call_operand.hbm [shape: f32[2,4,256], index: 6, kind: output, shape index: {0}]
  %s7 = inlined_call_operand.hbm [shape: f32[2,4,256], index: 7, kind: output, shape index: {1}]
  %8 = xla_tuple %s6, %s7
  %s9 = sld [smem:[#allocation0]]
  $region69: #{tpu_custom_call.1} parent=0
    _
  %s11 = ssub.s32 1, %s9
  %s12 = scalar_select 0, %s11, %s9
  $region1: #{tpu_custom_call.1} parent=0
    #allocation2 [shape = 'u8[8192]{0}', space=vmem, size = 0x2000, scoped, tag = 'input window, operand 1']
    #allocation3 [shape = 's32[2]{0}', space=sflag, size = 0x8, scoped, tag = 'scoped memory for tpu_custom_call.1']
    #allocation4 [shape = 's32[2]{0}', space=sflag, size = 0x8, scoped, tag = 'scoped memory for tpu_custom_call.1']
    #allocation5 [shape = 'u8[8192]{0}', space=vmem, size = 0x2000, scoped, tag = 'output window, operand 0']
    #allocation6 [shape = 'u8[8192]{0}', space=vmem, size = 0x2000, scoped, tag = 'output window, operand 1']
    #allocation7 [shape = 's32[2]{0}', space=sflag, size = 0x8, scoped, tag = 'scoped memory for tpu_custom_call.1']
    %13 = vsyncpa [#allocation3], 0
    %s14 = scalar_lea.sflag [#allocation3], 1
    %15 = vsyncpa %s14, 0
    %16 = vsyncpa [#allocation4], 0
    %s17 = scalar_lea.sflag [#allocation4], 1
    %18 = vsyncpa %s17, 0
    %19 = vsyncpa [#allocation7], 0
    %s20 = scalar_lea.sflag [#allocation7], 1
    %21 = vsyncpa %s20, 0
    loop: start=0, step=1, limit=4
    $region2: #{tpu_custom_call.1} parent=1 // loop_pre_header
      _
    $region3: #{tpu_custom_call.1} parent=1 // loop_header
      %s23 = sphi 0, %s27
      %p24 = scmp.ge.s32.totalorder %s23, 4
      %s33 = sphi 0, %s35
      %s36 = sphi 0, %s33
      %s37 = sphi 0, %s36
      %s53 = sphi 0, %s37
      %s59 = sphi 0, %s61
      %s62 = sphi 0, %s59
      %s63 = sphi 0, %s62
      %s79 = sphi 0, %s63
      %s83 = sphi 0, %s83
      %s85 = sphi 0, %s83
      %s86 = sphi 0, %s85
      %s100 = sphi 0, %s86
      %s104 = sphi 0, %s104
      %s106 = sphi 0, %s104
      %s107 = sphi 0, %s106
      %s121 = sphi 0, %s107
      %s125 = sphi 0, %s125
      %s127 = sphi 0, %s125
      %s128 = sphi 0, %s127
      %s142 = sphi 0, %s128
      %s146 = sphi 0, %s146
      %s148 = sphi 0, %s146
      %s149 = sphi 0, %s148
      %s163 = sphi 0, %s149
      %s169 = sphi 0, %s171
      %s172 = sphi 0, %s169
      %s173 = sphi 0, %s172
      %s189 = sphi 0, %s173
      %s195 = sphi 0, %s197
      %s198 = sphi 0, %s195
      %s199 = sphi 0, %s198
      %s215 = sphi 0, %s199
    $region4: #{tpu_custom_call.1} parent=1 // loop_header_branch
      %26 = sbr.rel (%p24) target = $region8
    $region5: #{tpu_custom_call.1} parent=1 // loop_body
      %s28 = ssub.s32 %s23, 1
      %s29 = ssub.s32 %s23, 2
      %s30 = sadd.s32 %s23, 1
      %s31 = ssub.s32 %s23, %s30
      %p32 = scmp.eq.s32.totalorder %s31, 0
      %s34 = sadd.s32 %s33, 1
      %s35 = scalar_select %p32, %s33, %s34
      %p38 = pneg %p32
      %p39 = scmp.eq.s32.totalorder %s23, 1
      %p40 = por %p38, %p39
      %p41 = scmp.ne.s32.totalorder %s33, %s36
      %p42 = scmp.eq.s32.totalorder %s23, 0
      %p43 = por %p41, %p42
      %p44 = scmp.ne.s32.totalorder %s33, %s36
      %p45 = scmp.eq.s32.totalorder %s28, 1
      %p46 = por %p44, %p45
      %p47 = scmp.ne.s32.totalorder %s36, %s37
      %p48 = scmp.eq.s32.totalorder %s28, 0
      %p49 = por %p47, %p48
      %p50 = scmp.ne.s32.totalorder %s36, %s37
      %p51 = scmp.eq.s32.totalorder %s29, 1
      %p52 = por %p50, %p51
      %p54 = scmp.ne.s32.totalorder %s37, %s53
      %p55 = scmp.eq.s32.totalorder %s29, 0
      %p56 = por %p54, %p55
      %s57 = ssub.s32 %s23, %s30
      %p58 = scmp.eq.s32.totalorder %s57, 0
      %s60 = sadd.s32 %s59, 1
      %s61 = scalar_select %p58, %s59, %s60
      %p64 = pneg %p58
      %p65 = scmp.eq.s32.totalorder %s23, 1
      %p66 = por %p64, %p65
      %p67 = scmp.ne.s32.totalorder %s59, %s62
      %p68 = scmp.eq.s32.totalorder %s23, 0
      %p69 = por %p67, %p68
      %p70 = scmp.ne.s32.totalorder %s59, %s62
      %p71 = scmp.eq.s32.totalorder %s28, 1
      %p72 = por %p70, %p71
      %p73 = scmp.ne.s32.totalorder %s62, %s63
      %p74 = scmp.eq.s32.totalorder %s28, 0
      %p75 = por %p73, %p74
      %p76 = scmp.ne.s32.totalorder %s62, %s63
      %p77 = scmp.eq.s32.totalorder %s29, 1
      %p78 = por %p76, %p77
      %p80 = scmp.ne.s32.totalorder %s63, %s79
      %p81 = scmp.eq.s32.totalorder %s29, 0
      %p82 = por %p80, %p81
      %s84 = sadd.s32 %s83, 1
      %p87 = scmp.eq.s32.totalorder %s23, 1
      %p88 = scmp.ne.s32.totalorder %s83, %s85
      %p89 = scmp.eq.s32.totalorder %s23, 0
      %p90 = por %p88, %p89
      %p91 = scmp.ne.s32.totalorder %s83, %s85
      %p92 = scmp.eq.s32.totalorder %s28, 1
      %p93 = por %p91, %p92
      %p94 = scmp.ne.s32.totalorder %s85, %s86
      %p95 = scmp.eq.s32.totalorder %s28, 0
      %p96 = por %p94, %p95
      %p97 = scmp.ne.s32.totalorder %s85, %s86
      %p98 = scmp.eq.s32.totalorder %s29, 1
      %p99 = por %p97, %p98
      %p101 = scmp.ne.s32.totalorder %s86, %s100
      %p102 = scmp.eq.s32.totalorder %s29, 0
      %p103 = por %p101, %p102
      %s105 = sadd.s32 %s104, 1
      %p108 = scmp.eq.s32.totalorder %s23, 1
      %p109 = scmp.ne.s32.totalorder %s104, %s106
      %p110 = scmp.eq.s32.totalorder %s23, 0
      %p111 = por %p109, %p110
      %p112 = scmp.ne.s32.totalorder %s104, %s106
      %p113 = scmp.eq.s32.totalorder %s28, 1
      %p114 = por %p112, %p113
      %p115 = scmp.ne.s32.totalorder %s106, %s107
      %p116 = scmp.eq.s32.totalorder %s28, 0
      %p117 = por %p115, %p116
      %p118 = scmp.ne.s32.totalorder %s106, %s107
      %p119 = scmp.eq.s32.totalorder %s29, 1
      %p120 = por %p118, %p119
      %p122 = scmp.ne.s32.totalorder %s107, %s121
      %p123 = scmp.eq.s32.totalorder %s29, 0
      %p124 = por %p122, %p123
      %s126 = sadd.s32 %s125, 1
      %p129 = scmp.eq.s32.totalorder %s23, 1
      %p130 = scmp.ne.s32.totalorder %s125, %s127
      %p131 = scmp.eq.s32.totalorder %s23, 0
      %p132 = por %p130, %p131
      %p133 = scmp.ne.s32.totalorder %s125, %s127
      %p134 = scmp.eq.s32.totalorder %s28, 1
      %p135 = por %p133, %p134
      %p136 = scmp.ne.s32.totalorder %s127, %s128
      %p137 = scmp.eq.s32.totalorder %s28, 0
      %p138 = por %p136, %p137
      %p139 = scmp.ne.s32.totalorder %s127, %s128
      %p140 = scmp.eq.s32.totalorder %s29, 1
      %p141 = por %p139, %p140
      %p143 = scmp.ne.s32.totalorder %s128, %s142
      %p144 = scmp.eq.s32.totalorder %s29, 0
      %p145 = por %p143, %p144
      %s147 = sadd.s32 %s146, 1
      %p150 = scmp.eq.s32.totalorder %s23, 1
      %p151 = scmp.ne.s32.totalorder %s146, %s148
      %p152 = scmp.eq.s32.totalorder %s23, 0
      %p153 = por %p151, %p152
      %p154 = scmp.ne.s32.totalorder %s146, %s148
      %p155 = scmp.eq.s32.totalorder %s28, 1
      %p156 = por %p154, %p155
      %p157 = scmp.ne.s32.totalorder %s148, %s149
      %p158 = scmp.eq.s32.totalorder %s28, 0
      %p159 = por %p157, %p158
      %p160 = scmp.ne.s32.totalorder %s148, %s149
      %p161 = scmp.eq.s32.totalorder %s29, 1
      %p162 = por %p160, %p161
      %p164 = scmp.ne.s32.totalorder %s149, %s163
      %p165 = scmp.eq.s32.totalorder %s29, 0
      %p166 = por %p164, %p165
      %s167 = ssub.s32 %s23, %s30
      %p168 = scmp.eq.s32.totalorder %s167, 0
      %s170 = sadd.s32 %s169, 1
      %s171 = scalar_select %p168, %s169, %s170
      %p174 = pneg %p168
      %p175 = scmp.eq.s32.totalorder %s23, 1
      %p176 = por %p174, %p175
      %p177 = scmp.ne.s32.totalorder %s169, %s172
      %p178 = scmp.eq.s32.totalorder %s23, 0
      %p179 = por %p177, %p178
      %p180 = scmp.ne.s32.totalorder %s169, %s172
      %p181 = scmp.eq.s32.totalorder %s28, 1
      %p182 = por %p180, %p181
      %p183 = scmp.ne.s32.totalorder %s172, %s173
      %p184 = scmp.eq.s32.totalorder %s28, 0
      %p185 = por %p183, %p184
      %p186 = scmp.ne.s32.totalorder %s172, %s173
      %p187 = scmp.eq.s32.totalorder %s29, 1
      %p188 = por %p186, %p187
      %p190 = scmp.ne.s32.totalorder %s173, %s189
      %p191 = scmp.eq.s32.totalorder %s29, 0
      %p192 = por %p190, %p191
      %s193 = ssub.s32 %s23, %s30
      %p194 = scmp.eq.s32.totalorder %s193, 0
      %s196 = sadd.s32 %s195, 1
      %s197 = scalar_select %p194, %s195, %s196
      %p200 = pneg %p194
      %p201 = scmp.eq.s32.totalorder %s23, 1
      %p202 = por %p200, %p201
      %p203 = scmp.ne.s32.totalorder %s195, %s198
      %p204 = scmp.eq.s32.totalorder %s23, 0
      %p205 = por %p203, %p204
      %p206 = scmp.ne.s32.totalorder %s195, %s198
      %p207 = scmp.eq.s32.totalorder %s28, 1
      %p208 = por %p206, %p207
      %p209 = scmp.ne.s32.totalorder %s198, %s199
      %p210 = scmp.eq.s32.totalorder %s28, 0
      %p211 = por %p209, %p210
      %p212 = scmp.ne.s32.totalorder %s198, %s199
      %p213 = scmp.eq.s32.totalorder %s29, 1
      %p214 = por %p212, %p213
      %p216 = scmp.ne.s32.totalorder %s199, %s215
      %p217 = scmp.eq.s32.totalorder %s29, 0
      %p218 = por %p216, %p217
      %p219 = scmp.le.s32.totalorder 1, %s23
      %p220 = scmp.lt.s32.totalorder %s23, 3
      %p221 = pnand %p219, %p220
      %p222 = pneg %p221
      // Predicated region
      $region9: #{tpu_custom_call.1} parent=5 // pred_check
        _
      $region10: #{tpu_custom_call.1} parent=5 // pred_check_branch
        %224 = sbr.rel (%p221) target = $region12
      $region11: #{tpu_custom_call.1} parent=5 // pred_region
        %s225 = ssub.s32 %s23, 1
        // Predicated region
        $region13: #{tpu_custom_call.1} parent=11 // pred_check
          %p226 = pneg %p96
        $region14: #{tpu_custom_call.1} parent=11 // pred_check_branch
          %228 = sbr.rel (%p226) target = $region16
        $region15: #{tpu_custom_call.1} parent=11 // pred_region
          _
        $region16: #{tpu_custom_call.1} parent=11 // pred_fallthru
          _
        // Predicated region
        $region17: #{tpu_custom_call.1} parent=11 // pred_check
          %p229 = pneg %p117
        $region18: #{tpu_custom_call.1} parent=11 // pred_check_branch
          %231 = sbr.rel (%p229) target = $region20
        $region19: #{tpu_custom_call.1} parent=11 // pred_region
          _
        $region20: #{tpu_custom_call.1} parent=11 // pred_fallthru
          _
        // Predicated region
        $region21: #{tpu_custom_call.1} parent=11 // pred_check
          %p232 = pneg %p138
        $region22: #{tpu_custom_call.1} parent=11 // pred_check_branch
          %234 = sbr.rel (%p232) target = $region24
        $region23: #{tpu_custom_call.1} parent=11 // pred_region
          _
        $region24: #{tpu_custom_call.1} parent=11 // pred_fallthru
          _
        // Predicated region
        $region25: #{tpu_custom_call.1} parent=11 // pred_check
          %p235 = pneg %p159
        $region26: #{tpu_custom_call.1} parent=11 // pred_check_branch
          %237 = sbr.rel (%p235) target = $region28
        $region27: #{tpu_custom_call.1} parent=11 // pred_region
          _
        $region28: #{tpu_custom_call.1} parent=11 // pred_fallthru
          _
      $region12: #{tpu_custom_call.1} parent=5 // pred_fallthru
        _
      %p238 = scmp.lt.s32.totalorder %s23, 2
      // Predicated region
      $region29: #{tpu_custom_call.1} parent=5 // pred_check
        %p239 = pneg %p238
      $region30: #{tpu_custom_call.1} parent=5 // pred_check_branch
        %241 = sbr.rel (%p239) target = $region32
      $region31: #{tpu_custom_call.1} parent=5 // pred_region
        // Predicated region
        $region33: #{tpu_custom_call.1} parent=31 // pred_check
          %p242 = pneg %p43
        $region34: #{tpu_custom_call.1} parent=31 // pred_check_branch
          %244 = sbr.rel (%p242) target = $region36
        $region35: #{tpu_custom_call.1} parent=31 // pred_region
          %p245 = scmp.lt.s32.totalorder %s23, 1
          %s246 = scalar_select %p245, %s23, 1
          %s247 = smul.addr %s246, 2
          %s248 = smul.addr %s247, 4
          %s249 = scalar_lea.vmem %s0, %s248
        $region36: #{tpu_custom_call.1} parent=31 // pred_fallthru
          _
        // Predicated region
        $region37: #{tpu_custom_call.1} parent=31 // pred_check
          %p250 = pneg %p69
        $region38: #{tpu_custom_call.1} parent=31 // pred_check_branch
          %252 = sbr.rel (%p250) target = $region40
        $region39: #{tpu_custom_call.1} parent=31 // pred_region
          %s253 = sand.u32 %s59, 1
          %s254 = scalar_lea.sflag [#allocation3], %s253
          %s255 = sand.u32 %s59, 1
          %s256 = smul.addr %s255, 8
          %s257 = scalar_lea.vmem [#allocation2], %s256
          %s259 = ssub.s32 128, 128
          %260 = vsyncadd %s254, %s259
          %s261 = smul.addr %s23, 2
          %s262 = smul.addr %s261, 64
          %s263 = scalar_lea.hbm %s1, %s262
          %s265 = sshll.u32 %s257, 4
          %s266 = int_to_ptr.vmem [resolvable:$true] %s265
          %268 = dma.hbm_to_vmem [thread:$0]  %s263, 128, %s266, %s254
        $region40: #{tpu_custom_call.1} parent=31 // pred_fallthru
          _
      $region32: #{tpu_custom_call.1} parent=5 // pred_fallthru
        _
      %p269 = scmp.le.s32.totalorder 1, %s23
      %p270 = scmp.lt.s32.totalorder %s23, 3
      %p271 = pnand %p269, %p270
      %p272 = pneg %p271
      // Predicated region
      $region41: #{tpu_custom_call.1} parent=5 // pred_check
        _
      $region42: #{tpu_custom_call.1} parent=5 // pred_check_branch
        %274 = sbr.rel (%p271) target = $region44
      $region43: #{tpu_custom_call.1} parent=5 // pred_region
        %s275 = ssub.s32 %s23, 1
        %s276 = sand.u32 %s62, 1
        %s277 = scalar_lea.sflag [#allocation3], %s276
        %s278 = sand.u32 %s62, 1
        %s279 = smul.addr %s278, 8
        %s280 = scalar_lea.vmem [#allocation2], %s279
        // Predicated region
        $region45: #{tpu_custom_call.1} parent=43 // pred_check
          %p281 = pneg %p75
        $region46: #{tpu_custom_call.1} parent=43 // pred_check_branch
          %283 = sbr.rel (%p281) target = $region48
        $region47: #{tpu_custom_call.1} parent=43 // pred_region
          %284 = dma.done %s277, 128
        $region48: #{tpu_custom_call.1} parent=43 // pred_fallthru
          _
        %p285 = scmp.lt.s32.totalorder %s28, 1
        %s286 = scalar_select %p285, %s28, 1
        %s287 = smul.addr %s286, 2
        %s288 = smul.addr %s287, 4
        %s289 = scalar_lea.vmem %s0, %s288
        %p290 = pneg %p49
        %p291 = pneg %p46
        %s292 = sand.u32 %s62, 1
        %s293 = scalar_lea.sflag [#allocation3], %s292
        %s294 = sand.u32 %s62, 1
        %s295 = smul.addr %s294, 8
        %s296 = scalar_lea.vmem [#allocation2], %s295
        %p297 = pneg %p75
        %p298 = pneg %p72
        %p299 = pneg %p96
        %p300 = pneg %p93
        %p301 = pneg %p117
        %p302 = pneg %p114
        %p303 = pneg %p138
        %p304 = pneg %p135
        %p305 = pneg %p159
        %p306 = pneg %p156
        %p307 = pneg %p185
        %p308 = pneg %p182
        %s309 = sand.u32 %s172, 1
        %s310 = scalar_lea.sflag [#allocation4], %s309
        %s311 = sand.u32 %s172, 1
        %s312 = smul.addr %s311, 8
        %s313 = scalar_lea.vmem [#allocation5], %s312
        %p314 = pneg %p211
        %p315 = pneg %p208
        %s316 = sand.u32 %s198, 1
        %s317 = scalar_lea.sflag [#allocation7], %s316
        %s318 = sand.u32 %s198, 1
        %s319 = smul.addr %s318, 8
        %s320 = scalar_lea.vmem [#allocation6], %s319
        %p321 = scmp.lt.s32.totalorder %s28, 1
        %s322 = scalar_select %p321, %s28, 1
        %s323 = smul.addr %s322, 2
        %s324 = smul.addr %s323, 4
        %s325 = scalar_lea.vmem %s0, %s324
        %v326 = vld [vmem:[%s3] sm:$0x3]
        %v327 = vld [vmem:[%s325] sm:$0xff]
        %v329 = vcombine.high %v327, %v327
        %vm331 = vcmask 1043456
        %v332 = vsel %vm331, %v327, 0.0
        %v333 = vsel %vm331, %v329, 0.0
        %v334 = vadd.f32 %v332, %v333
        %335 = vadd.xlane.f32.xlu0 %v334
        %v336 = vpop.xlane.xlu0 %335
        %v337 = vmul.f32 %v336, 0.00390625
        %v338 = vld [vmem:[%s2] sm:$0x3]
        %vm339 = vcmask 31744
        %v341 = vsel %vm339, %v338, 0
        %v344 = vsel %vm331, %v337, 0
        %346 = vmatprep.subr.mxu0 0.0
        %347 = vmatpush1.msra.mxu0 0.0
        %348 = vmatprep.subr.mxu0 0.0
        %349 = vmatpush1.msra.mxu0 0.0
        %350 = vmatprep.subr.mxu0 0.0
        %351 = vmatpush1.msra.mxu0 0.0
        %352 = vmatprep.subr.mxu0 0.0
        %353 = vmatpush1.msra.mxu0 0.0
        %354 = vmatprep.subr.mxu0 0.0
        %355 = vmatpush1.msra.mxu0 0.0
        %356 = vmatprep.subr.mxu0 0.0
        %357 = vmatpush1.msra.mxu0 0.0
        %358 = vmatprep.subr.mxu0 0.0
        %359 = vmatpush1.msra.mxu0 0.0
        %360 = vmatprep.subr.mxu0 0.0
        %361 = vmatpush1.msra.mxu0 0.0
        %362 = vmatprep.subr.mxu0 0.0
        %363 = vmatpush1.msra.mxu0 0.0
        %364 = vmatprep.subr.mxu0 0.0
        %365 = vmatpush1.msra.mxu0 0.0
        %366 = vmatprep.subr.mxu0 0.0
        %367 = vmatpush1.msra.mxu0 0.0
        %368 = vmatprep.subr.mxu0 0.0
        %369 = vmatpush1.msra.mxu0 0.0
        %370 = vmatprep.subr.mxu0 0.0
        %371 = vmatpush1.msra.mxu0 0.0
        %372 = vmatprep.subr.mxu0 0.0
        %373 = vmatpush1.msra.mxu0 0.0
        %374 = vmatprep.subr.mxu0 0.0
        %375 = vmatpush1.msra.mxu0 0.0
        %376 = vmatprep.subr.mxu0 0.0
        %377 = vmatpush1.msra.mxu0 %v344
        %378 = vmatprep.subr.mxu0 0.0
        %379 = vmatpush2.msra.mxu0 0.0
        %380 = vmatprep.subr.mxu0 0.0
        %381 = vmatpush2.msra.mxu0 0.0
        %382 = vmatprep.subr.mxu0 0.0
        %383 = vmatpush2.msra.mxu0 0.0
        %384 = vmatprep.subr.mxu0 0.0
        %385 = vmatpush2.msra.mxu0 0.0
        %386 = vmatprep.subr.mxu0 0.0
        %387 = vmatpush2.msra.mxu0 0.0
        %388 = vmatprep.subr.mxu0 0.0
        %389 = vmatpush2.msra.mxu0 0.0
        %390 = vmatprep.subr.mxu0 0.0
        %391 = vmatpush2.msra.mxu0 0.0
        %392 = vmatprep.subr.mxu0 0.0
        %393 = vmatpush2.msra.mxu0 0.0
        %394 = vmatprep.subr.mxu0 0.0
        %395 = vmatpush2.msra.mxu0 0.0
        %396 = vmatprep.subr.mxu0 0.0
        %397 = vmatpush2.msra.mxu0 0.0
        %398 = vmatprep.subr.mxu0 0.0
        %399 = vmatpush2.msra.mxu0 0.0
        %400 = vmatprep.subr.mxu0 0.0
        %401 = vmatpush2.msra.mxu0 0.0
        %402 = vmatprep.subr.mxu0 0.0
        %403 = vmatpush2.msra.mxu0 0.0
        %404 = vmatprep.subr.mxu0 0.0
        %405 = vmatpush2.msra.mxu0 0.0
        %406 = vmatprep.subr.mxu0 0.0
        %407 = vmatpush2.msra.mxu0 0.0
        %408 = vmatprep.subr.mxu0 0.0
        %409 = vmatpush2.msra.mxu0 0.0
        %410 = vmatprep.mubr.f32.mxu0 0.0
        %411 = vmatmul.mubr.f32.gmra.mxu0 %v341
        %v412 = vpop.f32.mrf.mxu0
        %v413 = vadd.f32 0.0, %v412
        %v414 = vpop.f32.mrf.mxu0
        %415 = vdwg.mxu0
        %v416 = vadd.f32 %v326, %v413
        %v417 = vld [vmem:[%s280] sm:$0xff]
        %v419 = vcombine.high %v417, %v417
        %v421 = vsel %vm331, %v417, 0.0
        %v422 = vsel %vm331, %v419, 0.0
        %v423 = vadd.f32 %v421, %v422
        %424 = vadd.xlane.f32.xlu0 %v423
        %v425 = vpop.xlane.xlu0 %424
        %v426 = vmul.f32 %v425, 0.00390625
        %s427 = scalar_lea.vmem %s2, 2
        %v428 = vld [vmem:[%s427] sm:$0x3]
        %v430 = vsel %vm339, %v428, 0
        %v433 = vsel %vm331, %v426, 0
        %435 = vmatprep.subr.mxu0 0.0
        %436 = vmatpush1.msra.mxu0 0.0
        %437 = vmatprep.subr.mxu0 0.0
        %438 = vmatpush1.msra.mxu0 0.0
        %439 = vmatprep.subr.mxu0 0.0
        %440 = vmatpush1.msra.mxu0 0.0
        %441 = vmatprep.subr.mxu0 0.0
        %442 = vmatpush1.msra.mxu0 0.0
        %443 = vmatprep.subr.mxu0 0.0
        %444 = vmatpush1.msra.mxu0 0.0
        %445 = vmatprep.subr.mxu0 0.0
        %446 = vmatpush1.msra.mxu0 0.0
        %447 = vmatprep.subr.mxu0 0.0
        %448 = vmatpush1.msra.mxu0 0.0
        %449 = vmatprep.subr.mxu0 0.0
        %450 = vmatpush1.msra.mxu0 0.0
        %451 = vmatprep.subr.mxu0 0.0
        %452 = vmatpush1.msra.mxu0 0.0
        %453 = vmatprep.subr.mxu0 0.0
        %454 = vmatpush1.msra.mxu0 0.0
        %455 = vmatprep.subr.mxu0 0.0
        %456 = vmatpush1.msra.mxu0 0.0
        %457 = vmatprep.subr.mxu0 0.0
        %458 = vmatpush1.msra.mxu0 0.0
        %459 = vmatprep.subr.mxu0 0.0
        %460 = vmatpush1.msra.mxu0 0.0
        %461 = vmatprep.subr.mxu0 0.0
        %462 = vmatpush1.msra.mxu0 0.0
        %463 = vmatprep.subr.mxu0 0.0
        %464 = vmatpush1.msra.mxu0 0.0
        %465 = vmatprep.subr.mxu0 0.0
        %466 = vmatpush1.msra.mxu0 %v433
        %467 = vmatprep.subr.mxu0 0.0
        %468 = vmatpush2.msra.mxu0 0.0
        %469 = vmatprep.subr.mxu0 0.0
        %470 = vmatpush2.msra.mxu0 0.0
        %471 = vmatprep.subr.mxu0 0.0
        %472 = vmatpush2.msra.mxu0 0.0
        %473 = vmatprep.subr.mxu0 0.0
        %474 = vmatpush2.msra.mxu0 0.0
        %475 = vmatprep.subr.mxu0 0.0
        %476 = vmatpush2.msra.mxu0 0.0
        %477 = vmatprep.subr.mxu0 0.0
        %478 = vmatpush2.msra.mxu0 0.0
        %479 = vmatprep.subr.mxu0 0.0
        %480 = vmatpush2.msra.mxu0 0.0
        %481 = vmatprep.subr.mxu0 0.0
        %482 = vmatpush2.msra.mxu0 0.0
        %483 = vmatprep.subr.mxu0 0.0
        %484 = vmatpush2.msra.mxu0 0.0
        %485 = vmatprep.subr.mxu0 0.0
        %486 = vmatpush2.msra.mxu0 0.0
        %487 = vmatprep.subr.mxu0 0.0
        %488 = vmatpush2.msra.mxu0 0.0
        %489 = vmatprep.subr.mxu0 0.0
        %490 = vmatpush2.msra.mxu0 0.0
        %491 = vmatprep.subr.mxu0 0.0
        %492 = vmatpush2.msra.mxu0 0.0
        %493 = vmatprep.subr.mxu0 0.0
        %494 = vmatpush2.msra.mxu0 0.0
        %495 = vmatprep.subr.mxu0 0.0
        %496 = vmatpush2.msra.mxu0 0.0
        %497 = vmatprep.subr.mxu0 0.0
        %498 = vmatpush2.msra.mxu0 0.0
        %499 = vmatprep.mubr.f32.mxu0 0.0
        %500 = vmatmul.mubr.f32.gmra.mxu0 %v430
        %v501 = vpop.f32.mrf.mxu0
        %v502 = vadd.f32 0.0, %v501
        %v503 = vpop.f32.mrf.mxu0
        %504 = vdwg.mxu0
        %v505 = vadd.f32 %v416, %v502
        %v506 = vmax.f32 %v505, 0.0
        %v507 = vld [vmem:[%s4] sm:$0xf]
        %v508 = vld [vmem:[%s5] sm:$0xf]
        %vm509 = vcmask 15360
        %v511 = vsel %vm509, %v507, 0
        %vm513 = vcmask 1041408
        %v515 = vsel %vm513, %v506, 0
        %517 = vmatprep.subr.mxu0 0.0
        %518 = vmatpush1.msra.mxu0 0.0
        %519 = vmatprep.subr.mxu0 0.0
        %520 = vmatpush1.msra.mxu0 0.0
        %521 = vmatprep.subr.mxu0 0.0
        %522 = vmatpush1.msra.mxu0 0.0
        %523 = vmatprep.subr.mxu0 0.0
        %524 = vmatpush1.msra.mxu0 0.0
        %525 = vmatprep.subr.mxu0 0.0
        %526 = vmatpush1.msra.mxu0 0.0
        %527 = vmatprep.subr.mxu0 0.0
        %528 = vmatpush1.msra.mxu0 0.0
        %529 = vmatprep.subr.mxu0 0.0
        %530 = vmatpush1.msra.mxu0 0.0
        %531 = vmatprep.subr.mxu0 0.0
        %532 = vmatpush1.msra.mxu0 0.0
        %533 = vmatprep.subr.mxu0 0.0
        %534 = vmatpush1.msra.mxu0 0.0
        %535 = vmatprep.subr.mxu0 0.0
        %536 = vmatpush1.msra.mxu0 0.0
        %537 = vmatprep.subr.mxu0 0.0
        %538 = vmatpush1.msra.mxu0 0.0
        %539 = vmatprep.subr.mxu0 0.0
        %540 = vmatpush1.msra.mxu0 0.0
        %541 = vmatprep.subr.mxu0 0.0
        %542 = vmatpush1.msra.mxu0 0.0
        %543 = vmatprep.subr.mxu0 0.0
        %544 = vmatpush1.msra.mxu0 0.0
        %545 = vmatprep.subr.mxu0 0.0
        %546 = vmatpush1.msra.mxu0 0.0
        %547 = vmatprep.subr.mxu0 0.0
        %548 = vmatpush1.msra.mxu0 %v515
        %549 = vmatprep.subr.mxu0 0.0
        %550 = vmatpush2.msra.mxu0 0.0
        %551 = vmatprep.subr.mxu0 0.0
        %552 = vmatpush2.msra.mxu0 0.0
        %553 = vmatprep.subr.mxu0 0.0
        %554 = vmatpush2.msra.mxu0 0.0
        %555 = vmatprep.subr.mxu0 0.0
        %556 = vmatpush2.msra.mxu0 0.0
        %557 = vmatprep.subr.mxu0 0.0
        %558 = vmatpush2.msra.mxu0 0.0
        %559 = vmatprep.subr.mxu0 0.0
        %560 = vmatpush2.msra.mxu0 0.0
        %561 = vmatprep.subr.mxu0 0.0
        %562 = vmatpush2.msra.mxu0 0.0
        %563 = vmatprep.subr.mxu0 0.0
        %564 = vmatpush2.msra.mxu0 0.0
        %565 = vmatprep.subr.mxu0 0.0
        %566 = vmatpush2.msra.mxu0 0.0
        %567 = vmatprep.subr.mxu0 0.0
        %568 = vmatpush2.msra.mxu0 0.0
        %569 = vmatprep.subr.mxu0 0.0
        %570 = vmatpush2.msra.mxu0 0.0
        %571 = vmatprep.subr.mxu0 0.0
        %572 = vmatpush2.msra.mxu0 0.0
        %573 = vmatprep.subr.mxu0 0.0
        %574 = vmatpush2.msra.mxu0 0.0
        %575 = vmatprep.subr.mxu0 0.0
        %576 = vmatpush2.msra.mxu0 0.0
        %577 = vmatprep.subr.mxu0 0.0
        %578 = vmatpush2.msra.mxu0 0.0
        %579 = vmatprep.subr.mxu0 0.0
        %580 = vmatpush2.msra.mxu0 0.0
        %581 = vmatprep.mubr.f32.mxu0 0.0
        %582 = vmatmul.mubr.f32.gmra.mxu0 %v511
        %v583 = vpop.f32.mrf.mxu0
        %v584 = vadd.f32 %v508, %v583
        %v585 = vpop.f32.mrf.mxu0
        %586 = vdwg.mxu0
        %v587 = vxor.u32 %v584, 2147483648
        %v588 = vmul.f32 %v587, 1.442695
        %v589 = vpow.pop %v588
        %v590 = vadd.f32 %v589, 1.0
        %v591 = vrcp.pop %v590
        %v592 = vmul.f32 1.0, %v591
        %594 = vset.pattern.permute.xlu0 0
        %595 = vperm.xlu0 %594, %v592
        %v596 = vpop.permute.xlu0 %595
        %v598 = vunpack.c.l.s4 839922192
        %v599 = vunpack.c.0.s8 %v598
        %v600 = vlaneseq
        %v601 = vshrl.u32 %v600, 7
        %v602 = vsub.s32 %v599, %v601
        %v603 = vrot.slane %v596, %v602
        %v605 = vmul.f32 %v327, %v603
        %606 = vst [vmem:[%s313] sm:$0xff] %v605
        %s607 = scalar_lea.vmem %s4, 4
        %v608 = vld [vmem:[%s607] sm:$0xf]
        %s609 = scalar_lea.vmem %s5, 4
        %v610 = vld [vmem:[%s609] sm:$0xf]
        %v612 = vsel %vm509, %v608, 0
        %614 = vmatprep.subr.mxu0 0.0
        %615 = vmatpush1.msra.mxu0 0.0
        %616 = vmatprep.subr.mxu0 0.0
        %617 = vmatpush1.msra.mxu0 0.0
        %618 = vmatprep.subr.mxu0 0.0
        %619 = vmatpush1.msra.mxu0 0.0
        %620 = vmatprep.subr.mxu0 0.0
        %621 = vmatpush1.msra.mxu0 0.0
        %622 = vmatprep.subr.mxu0 0.0
        %623 = vmatpush1.msra.mxu0 0.0
        %624 = vmatprep.subr.mxu0 0.0
        %625 = vmatpush1.msra.mxu0 0.0
        %626 = vmatprep.subr.mxu0 0.0
        %627 = vmatpush1.msra.mxu0 0.0
        %628 = vmatprep.subr.mxu0 0.0
        %629 = vmatpush1.msra.mxu0 0.0
        %630 = vmatprep.subr.mxu0 0.0
        %631 = vmatpush1.msra.mxu0 0.0
        %632 = vmatprep.subr.mxu0 0.0
        %633 = vmatpush1.msra.mxu0 0.0
        %634 = vmatprep.subr.mxu0 0.0
        %635 = vmatpush1.msra.mxu0 0.0
        %636 = vmatprep.subr.mxu0 0.0
        %637 = vmatpush1.msra.mxu0 0.0
        %638 = vmatprep.subr.mxu0 0.0
        %639 = vmatpush1.msra.mxu0 0.0
        %640 = vmatprep.subr.mxu0 0.0
        %641 = vmatpush1.msra.mxu0 0.0
        %642 = vmatprep.subr.mxu0 0.0
        %643 = vmatpush1.msra.mxu0 0.0
        %644 = vmatprep.subr.mxu0 0.0
        %645 = vmatpush1.msra.mxu0 %v515
        %646 = vmatprep.subr.mxu0 0.0
        %647 = vmatpush2.msra.mxu0 0.0
        %648 = vmatprep.subr.mxu0 0.0
        %649 = vmatpush2.msra.mxu0 0.0
        %650 = vmatprep.subr.mxu0 0.0
        %651 = vmatpush2.msra.mxu0 0.0
        %652 = vmatprep.subr.mxu0 0.0
        %653 = vmatpush2.msra.mxu0 0.0
        %654 = vmatprep.subr.mxu0 0.0
        %655 = vmatpush2.msra.mxu0 0.0
        %656 = vmatprep.subr.mxu0 0.0
        %657 = vmatpush2.msra.mxu0 0.0
        %658 = vmatprep.subr.mxu0 0.0
        %659 = vmatpush2.msra.mxu0 0.0
        %660 = vmatprep.subr.mxu0 0.0
        %661 = vmatpush2.msra.mxu0 0.0
        %662 = vmatprep.subr.mxu0 0.0
        %663 = vmatpush2.msra.mxu0 0.0
        %664 = vmatprep.subr.mxu0 0.0
        %665 = vmatpush2.msra.mxu0 0.0
        %666 = vmatprep.subr.mxu0 0.0
        %667 = vmatpush2.msra.mxu0 0.0
        %668 = vmatprep.subr.mxu0 0.0
        %669 = vmatpush2.msra.mxu0 0.0
        %670 = vmatprep.subr.mxu0 0.0
        %671 = vmatpush2.msra.mxu0 0.0
        %672 = vmatprep.subr.mxu0 0.0
        %673 = vmatpush2.msra.mxu0 0.0
        %674 = vmatprep.subr.mxu0 0.0
        %675 = vmatpush2.msra.mxu0 0.0
        %676 = vmatprep.subr.mxu0 0.0
        %677 = vmatpush2.msra.mxu0 0.0
        %678 = vmatprep.mubr.f32.mxu0 0.0
        %679 = vmatmul.mubr.f32.gmra.mxu0 %v612
        %v680 = vpop.f32.mrf.mxu0
        %v681 = vadd.f32 %v610, %v680
        %v682 = vpop.f32.mrf.mxu0
        %683 = vdwg.mxu0
        %v684 = vxor.u32 %v681, 2147483648
        %v685 = vmul.f32 %v684, 1.442695
        %v686 = vpow.pop %v685
        %v687 = vadd.f32 %v686, 1.0
        %v688 = vrcp.pop %v687
        %v689 = vmul.f32 1.0, %v688
        %v690 = vld [vmem:[%s280] sm:$0xff]
        %692 = vset.pattern.permute.xlu0 0
        %693 = vperm.xlu0 %692, %v689
        %v694 = vpop.permute.xlu0 %693
        %v696 = vunpack.c.l.s4 839922192
        %v697 = vunpack.c.0.s8 %v696
        %v698 = vlaneseq
        %v699 = vshrl.u32 %v698, 7
        %v700 = vsub.s32 %v697, %v699
        %v701 = vrot.slane %v694, %v700
        %v703 = vmul.f32 %v690, %v701
        %704 = vst [vmem:[%s320] sm:$0xff] %v703
        %s705 = sand.u32 %s172, 1
        %s706 = scalar_lea.sflag [#allocation4], %s705
        %s707 = sand.u32 %s172, 1
        %s708 = smul.addr %s707, 8
        %s709 = scalar_lea.vmem [#allocation5], %s708
        %s710 = sand.u32 %s198, 1
        %s711 = scalar_lea.sflag [#allocation7], %s710
        %s712 = sand.u32 %s198, 1
        %s713 = smul.addr %s712, 8
        %s714 = scalar_lea.vmem [#allocation6], %s713
        // Predicated region
        $region49: #{tpu_custom_call.1} parent=43 // pred_check
          %p715 = pneg %p182
        $region50: #{tpu_custom_call.1} parent=43 // pred_check_branch
          %717 = sbr.rel (%p715) target = $region52
        $region51: #{tpu_custom_call.1} parent=43 // pred_region
          %s719 = ssub.s32 128, 128
          %720 = vsyncadd %s706, %s719
          %s721 = smul.addr %s28, 2
          %s722 = smul.addr %s721, 64
          %s723 = scalar_lea.hbm %s6, %s722
          %s725 = sshll.u32 %s709, 4
          %s726 = int_to_ptr.vmem [resolvable:$true] %s725
          %728 = dma.vmem_to_hbm [thread:$0]  %s726, 128, %s723, %s706
        $region52: #{tpu_custom_call.1} parent=43 // pred_fallthru
          _
        // Predicated region
        $region53: #{tpu_custom_call.1} parent=43 // pred_check
          %p729 = pneg %p208
        $region54: #{tpu_custom_call.1} parent=43 // pred_check_branch
          %731 = sbr.rel (%p729) target = $region56
        $region55: #{tpu_custom_call.1} parent=43 // pred_region
          %s733 = ssub.s32 128, 128
          %734 = vsyncadd %s711, %s733
          %s735 = smul.addr %s28, 2
          %s736 = smul.addr %s735, 64
          %s737 = scalar_lea.hbm %s7, %s736
          %s739 = sshll.u32 %s714, 4
          %s740 = int_to_ptr.vmem [resolvable:$true] %s739
          %742 = dma.vmem_to_hbm [thread:$0]  %s740, 128, %s737, %s711
        $region56: #{tpu_custom_call.1} parent=43 // pred_fallthru
          _
      $region44: #{tpu_custom_call.1} parent=5 // pred_fallthru
        _
      %p743 = scmp.le.s32.totalorder 2, %s23
      // Predicated region
      $region57: #{tpu_custom_call.1} parent=5 // pred_check
        %p744 = pneg %p743
      $region58: #{tpu_custom_call.1} parent=5 // pred_check_branch
        %746 = sbr.rel (%p744) target = $region60
      $region59: #{tpu_custom_call.1} parent=5 // pred_region
        %s747 = ssub.s32 %s23, 2
        // Predicated region
        $region61: #{tpu_custom_call.1} parent=59 // pred_check
          %p748 = pneg %p188
        $region62: #{tpu_custom_call.1} parent=59 // pred_check_branch
          %750 = sbr.rel (%p748) target = $region64
        $region63: #{tpu_custom_call.1} parent=59 // pred_region
          %s751 = sand.u32 %s173, 1
          %s752 = scalar_lea.sflag [#allocation4], %s751
          %s753 = sand.u32 %s173, 1
          %s754 = smul.addr %s753, 8
          %s755 = scalar_lea.vmem [#allocation5], %s754
          %756 = dma.done %s752, 128
        $region64: #{tpu_custom_call.1} parent=59 // pred_fallthru
          _
        // Predicated region
        $region65: #{tpu_custom_call.1} parent=59 // pred_check
          %p757 = pneg %p214
        $region66: #{tpu_custom_call.1} parent=59 // pred_check_branch
          %759 = sbr.rel (%p757) target = $region68
        $region67: #{tpu_custom_call.1} parent=59 // pred_region
          %s760 = sand.u32 %s199, 1
          %s761 = scalar_lea.sflag [#allocation7], %s760
          %s762 = sand.u32 %s199, 1
          %s763 = smul.addr %s762, 8
          %s764 = scalar_lea.vmem [#allocation6], %s763
          %765 = dma.done %s761, 128
        $region68: #{tpu_custom_call.1} parent=59 // pred_fallthru
          _
      $region60: #{tpu_custom_call.1} parent=5 // pred_fallthru
        _
    $region6: #{tpu_custom_call.1} parent=1 // loop_footer
      %s27 = sadd.s32 1, %s23
    $region7: #{tpu_custom_call.1} parent=1 // loop_footer_branch
      %22 = sbr.rel target = $region3
    $region8: #{tpu_custom_call.1} parent=1 // loop_exit
      _
    %766 = vsyncpa [#allocation3], 1
    %s767 = scalar_lea.sflag [#allocation3], 1
    %768 = vsyncpa %s767, 1
    %769 = vsyncpa [#allocation4], 1
    %s770 = scalar_lea.sflag [#allocation4], 1
    %771 = vsyncpa %s770, 1
    %772 = vsyncpa [#allocation7], 1
    %s773 = scalar_lea.sflag [#allocation7], 1
    %774 = vsyncpa %s773, 1

</llo_original>
